<compile_context>
chip_gen: v5e
topology: v5e:2x2
jax: 0.10.0
libtpu: 0.0.40
codegen_flags: <defaults>
</compile_context>

<pallas_src>
import functools
import math

import jax
import jax.numpy as jnp
from jax.experimental import pallas as pl
from jax.experimental.pallas import tpu as pltpu


DIM_POS_ENCODING = 50
DROPOUT_P = 0.1          # nn.Dropout p; eval-mode dropout is the identity.
MAX_LEN = 5000


def make_pe_table(d_pe: int = DIM_POS_ENCODING, max_len: int = MAX_LEN,
                  dtype=jnp.float32) -> jnp.ndarray:
    """Sin/cos positional-encoding buffer, shape (max_len, d_pe).

    Built once at "init" (mirrors register_buffer) in the dtype the forward
    pass will use, so the hot path never re-slices or re-casts it.
    """
    position = jnp.arange(max_len, dtype=jnp.float32)[:, None]                 # (L, 1)
    div_term = jnp.exp(
        jnp.arange(0, d_pe, 2, dtype=jnp.float32) * (-math.log(10000.0) / d_pe)
    )                                                                          # (d_pe//2,)
    angles = position * div_term                                               # (L, d_pe//2)
    pe = jnp.zeros((max_len, d_pe), dtype=jnp.float32)
    pe = pe.at[:, 0::2].set(jnp.sin(angles))
    pe = pe.at[:, 1::2].set(jnp.cos(angles))
    return pe.astype(dtype)                                                    # (max_len, d_pe)


def _pe_concat_kernel(x_ref, pe_ref, o_ref, *, batch, d_x, d_pe):
    """One seq-tile in the lane-collapsed layout.

    x_ref:  (TS, batch * d_x)
    pe_ref: (TS, d_pe)
    o_ref:  (TS, batch * (d_x + d_pe))
    """
    pe = pe_ref[...]                                     # load once, reused per batch
    d_o = d_x + d_pe
    # TODO(synk): training-mode nn.Dropout (Bernoulli mask + 1/(1-p) rescale on
    # pe) is not reproduced; eval-mode dropout is the identity, used here.
    for b in range(batch):                               # tiny static unroll
        o_ref[:, b * d_o: b * d_o + d_x] = x_ref[:, b * d_x: (b + 1) * d_x]
        o_ref[:, b * d_o + d_x: (b + 1) * d_o] = pe


def _round_up(v: int, m: int) -> int:
    return ((v + m - 1) // m) * m


def _sublane_multiple(dtype) -> int:
    # Native sublane packing: f32 -> 8 rows/tile, bf16 -> 16, int8/fp8 -> 32.
    return max(8, 32 // jnp.dtype(dtype).itemsize)


def _pick_seq_tile(S, w_x, w_pe, w_out, dtype, vmem_budget_bytes=8 << 20):
    """Largest legal seq-tile whose PADDED, double-buffered blocks fit the budget.

    Blocks are 2-D (TS, W): TS maps to sublanes (rounded to the dtype's sublane
    multiple), W to lanes (rounded to 128).  Budget is far below the scoped
    VMEM limit on every generation (v5e 16 MiB default, v6e/v7x 32 MiB).
    """
    itemsize = jnp.dtype(dtype).itemsize
    sub = _sublane_multiple(dtype)
    padded_row_bytes = (_round_up(w_x, 128) + _round_up(w_pe, 128)
                        + _round_up(w_out, 128)) * itemsize
    ts = vmem_budget_bytes // (2 * padded_row_bytes)     # 2x: double buffering
    ts = min(int(ts), 1024)
    # Keep >= 2 grid steps when the sequence allows it, so the "parallel" grid
    # axis can actually be sharded across v7x's two TensorCores.
    if S > sub:
        ts = min(ts, _round_up((S + 1) // 2, sub))
    if ts >= S:
        return S                                         # single full block (always legal)
    return max(sub, (ts // sub) * sub)                   # divisible by 8 (16 for bf16)


def positional_encoding_forward(x: jnp.ndarray, pe_table: jnp.ndarray,
                                *, seq_tile: int | None = None) -> jnp.ndarray:
    """x: (seq_len, batch, d_x), pe_table: (max_len, d_pe) -> (S, B, d_x + d_pe)."""
    S, B, Dx = x.shape
    max_len, Dp = pe_table.shape
    if S > max_len:
        raise ValueError(f"seq_len={S} exceeds positional table max_len={max_len}")
    if pe_table.dtype != x.dtype:
        # Cold fallback; pre-build the table in the forward dtype to avoid this.
        pe_table = pe_table.astype(x.dtype)

    w_x, w_pe, w_out = B * Dx, Dp, B * (Dx + Dp)
    x2 = x.reshape(S, w_x)                               # contiguous view, free

    TS = seq_tile if seq_tile is not None else _pick_seq_tile(S, w_x, w_pe, w_out, x.dtype)
    grid = (pl.cdiv(S, TS),)

    itemsize = jnp.dtype(x.dtype).itemsize
    sub = _sublane_multiple(x.dtype)
    block_bytes = _round_up(TS, sub) * (
        _round_up(w_x, 128) + _round_up(w_pe, 128) + _round_up(w_out, 128)) * itemsize
    # Double-buffered working set + slack, clamped so it is safe everywhere
    # (<= 32 MiB scoped; v7x physical VMEM is only 64 MiB).
    vmem_limit = int(min(32 << 20, max(16 << 20, 4 * block_bytes)))

    bytes_accessed = int((S * (w_x + w_out) + grid[0] * TS * w_pe) * itemsize)

    out2 = pl.pallas_call(
        functools.partial(_pe_concat_kernel, batch=B, d_x=Dx, d_pe=Dp),
        out_shape=jax.ShapeDtypeStruct((S, w_out), x.dtype),
        grid=grid,
        in_specs=[
            pl.BlockSpec((TS, w_x), lambda i: (i, 0)),
            # Full (max_len, Dp) table passed; only the first cdiv(S, TS)
            # blocks are ever indexed, hence ever DMA'd.
            pl.BlockSpec((TS, w_pe), lambda i: (i, 0)),
        ],
        out_specs=pl.BlockSpec((TS, w_out), lambda i: (i, 0)),
        compiler_params=pltpu.CompilerParams(
            dimension_semantics=("parallel",),
            vmem_limit_bytes=vmem_limit,
        ),
        # Pure data movement: tell XLA's scheduler there is no compute here.
        cost_estimate=pl.CostEstimate(
            flops=0, transcendentals=0, bytes_accessed=bytes_accessed),
    )(x2, pe_table)

    return out2.reshape(S, B, Dx + Dp)


if __name__ == "__main__":
    key = jax.random.PRNGKey(0)
    seq_len, batch, d_x = 40, 2, 32          # module spec uses seq_len=40
    x = jax.random.normal(key, (seq_len, batch, d_x), dtype=jnp.float32)

    # Built once at "init" in the forward dtype (mirrors register_buffer).
    pe_table = make_pe_table(DIM_POS_ENCODING, MAX_LEN, dtype=x.dtype)

    out = jax.block_until_ready(positional_encoding_forward(x, pe_table))

    # Reference (eval-mode dropout == identity):
    # torch.cat((x, pe[:S].expand(-1, B, -1)), dim=2)
    ref = jnp.concatenate(
        [x, jnp.broadcast_to(pe_table[:seq_len, None, :],
                             (seq_len, batch, DIM_POS_ENCODING))],
        axis=2)
    assert out.shape == (seq_len, batch, d_x + DIM_POS_ENCODING), out.shape
    assert jnp.allclose(out, ref, atol=1e-6), "mismatch vs reference"

    # Also exercise a forced small tile (40 = 16 + 16 + 8: multi-step grid with
    # a partial edge block) to validate the tiled/pipelined path.
    out_tiled = jax.block_until_ready(
        positional_encoding_forward(x, pe_table, seq_tile=16))
    assert jnp.allclose(out_tiled, ref, atol=1e-6), "mismatch vs reference (tiled)"

    print("KERNEL_OK")
</pallas_src>

<mosaic_0001>
module attributes {stable_mosaic.version = 11 : i64} {
  func.func @_pe_concat_kernel(%arg0: i32, %arg1: memref<24x64xf32, #tpu.memory_space<vmem>>, %arg2: memref<24x50xf32, #tpu.memory_space<vmem>>, %arg3: memref<24x164xf32, #tpu.memory_space<vmem>>) attributes {dimension_semantics = [#tpu.dimension_semantics<parallel>], iteration_bounds = array<i64: 2>, scalar_prefetch = 0 : i64, scratch_operands = 0 : i64, tpu.core_type = #tpu.core_type<tc>, window_params = [{transform_indices = @transform_0, window_bounds = array<i64: 24, 64>}, {transform_indices = @transform_1, window_bounds = array<i64: 24, 50>}, {transform_indices = @transform_2, window_bounds = array<i64: 24, 164>}]} {
    %c0 = arith.constant 0 : index
    %c0_0 = arith.constant 0 : index
    %0 = vector.load %arg2[%c0, %c0_0] : memref<24x50xf32, #tpu.memory_space<vmem>>, vector<24x50xf32>
    %c0_1 = arith.constant 0 : index
    %c0_2 = arith.constant 0 : index
    %1 = vector.load %arg1[%c0_1, %c0_2] : memref<24x64xf32, #tpu.memory_space<vmem>>, vector<24x32xf32>
    %c0_3 = arith.constant 0 : index
    %c0_4 = arith.constant 0 : index
    %2 = vector.load %arg3[%c0_3, %c0_4] : memref<24x164xf32, #tpu.memory_space<vmem>>, vector<24x32xf32>
    tpu.vector_store %arg3[%c0_3, %c0_4], %1 {strides = array<i32>} : memref<24x164xf32, #tpu.memory_space<vmem>>, vector<24x32xf32>,
    %c0_5 = arith.constant 0 : index
    %c32 = arith.constant 32 : index
    %3 = vector.load %arg3[%c0_5, %c32] : memref<24x164xf32, #tpu.memory_space<vmem>>, vector<24x50xf32>
    tpu.vector_store %arg3[%c0_5, %c32], %0 {strides = array<i32>} : memref<24x164xf32, #tpu.memory_space<vmem>>, vector<24x50xf32>,
    %c0_6 = arith.constant 0 : index
    %c32_7 = arith.constant 32 : index
    %4 = vector.load %arg1[%c0_6, %c32_7] : memref<24x64xf32, #tpu.memory_space<vmem>>, vector<24x32xf32>
    %c0_8 = arith.constant 0 : index
    %c82 = arith.constant 82 : index
    %5 = vector.load %arg3[%c0_8, %c82] : memref<24x164xf32, #tpu.memory_space<vmem>>, vector<24x32xf32>
    tpu.vector_store %arg3[%c0_8, %c82], %4 {strides = array<i32>} : memref<24x164xf32, #tpu.memory_space<vmem>>, vector<24x32xf32>,
    %c0_9 = arith.constant 0 : index
    %c114 = arith.constant 114 : index
    %6 = vector.load %arg3[%c0_9, %c114] : memref<24x164xf32, #tpu.memory_space<vmem>>, vector<24x50xf32>
    tpu.vector_store %arg3[%c0_9, %c114], %0 {strides = array<i32>} : memref<24x164xf32, #tpu.memory_space<vmem>>, vector<24x50xf32>,
    return
  }
  func.func @transform_0(%arg0: i32) -> (i32, i32) {
    %c0_i32 = arith.constant 0 : i32
    %c0_i32_0 = arith.constant 0 : i32
    return %arg0, %c0_i32 : i32, i32
  }
  func.func @transform_1(%arg0: i32) -> (i32, i32) {
    %c0_i32 = arith.constant 0 : i32
    %c0_i32_0 = arith.constant 0 : i32
    return %arg0, %c0_i32 : i32, i32
  }
  func.func @transform_2(%arg0: i32) -> (i32, i32) {
    %c0_i32 = arith.constant 0 : i32
    %c0_i32_0 = arith.constant 0 : i32
    return %arg0, %c0_i32 : i32, i32
  }
}

</mosaic_0001>

<llo_original>
// kernel: tpu_custom_call.1
$region0: #{tpu_custom_call.1}
  #allocation0 [shape = 'u32[]', space=smem, size = 0x4, offset = 0x4, fixed_abs, tag = 'smem constant byte address 0x4 - core index']
  #allocation1 [shape = 'u32[72,128]{1,0:T(1,128)}', space=vmem, size = 0x9000, scoped, tag = 'internal scratch']
  %s0 = inlined_call_operand.vmem [shape: f32[40,64], index: 0, kind: input, shape index: {}]
  %s1 = inlined_call_operand.vmem [shape: f32[5000,50], index: 1, kind: input, shape index: {}]
  %s2 = inlined_call_operand.hbm [shape: f32[40,164], index: 2, kind: output, shape index: {}]
  %s3 = sld [smem:[#allocation0]]
  $region41: #{tpu_custom_call.1} parent=0
    _
  %s5 = ssub.s32 1, %s3
  %s6 = scalar_select 0, %s5, %s3
  $region1: #{tpu_custom_call.1} parent=0
    #allocation2 [shape = 'u8[49152]{0}', space=vmem, size = 0xc000, scoped, tag = 'output window, operand 0']
    #allocation3 [shape = 's32[2]{0}', space=sflag, size = 0x8, scoped, tag = 'scoped memory for tpu_custom_call.1']
    %7 = vsyncpa [#allocation3], 0
    %s8 = scalar_lea.sflag [#allocation3], 1
    %9 = vsyncpa %s8, 0
    loop: start=0, step=1, limit=4
    $region2: #{tpu_custom_call.1} parent=1 // loop_pre_header
      _
    $region3: #{tpu_custom_call.1} parent=1 // loop_header
      %s11 = sphi 0, %s15
      %p12 = scmp.ge.s32.totalorder %s11, 4
      %s21 = sphi 0, %s23
      %s24 = sphi 0, %s21
      %s25 = sphi 0, %s24
      %s41 = sphi 0, %s25
      %s47 = sphi 0, %s49
      %s50 = sphi 0, %s47
      %s51 = sphi 0, %s50
      %s67 = sphi 0, %s51
      %s73 = sphi 0, %s75
      %s76 = sphi 0, %s73
      %s77 = sphi 0, %s76
      %s93 = sphi 0, %s77
    $region4: #{tpu_custom_call.1} parent=1 // loop_header_branch
      %14 = sbr.rel (%p12) target = $region8
    $region5: #{tpu_custom_call.1} parent=1 // loop_body
      %s16 = ssub.s32 %s11, 1
      %s17 = ssub.s32 %s11, 2
      %s18 = sadd.s32 %s11, 1
      %s19 = ssub.s32 %s11, %s18
      %p20 = scmp.eq.s32.totalorder %s19, 0
      %s22 = sadd.s32 %s21, 1
      %s23 = scalar_select %p20, %s21, %s22
      %p26 = pneg %p20
      %p27 = scmp.eq.s32.totalorder %s11, 1
      %p28 = por %p26, %p27
      %p29 = scmp.ne.s32.totalorder %s21, %s24
      %p30 = scmp.eq.s32.totalorder %s11, 0
      %p31 = por %p29, %p30
      %p32 = scmp.ne.s32.totalorder %s21, %s24
      %p33 = scmp.eq.s32.totalorder %s16, 1
      %p34 = por %p32, %p33
      %p35 = scmp.ne.s32.totalorder %s24, %s25
      %p36 = scmp.eq.s32.totalorder %s16, 0
      %p37 = por %p35, %p36
      %p38 = scmp.ne.s32.totalorder %s24, %s25
      %p39 = scmp.eq.s32.totalorder %s17, 1
      %p40 = por %p38, %p39
      %p42 = scmp.ne.s32.totalorder %s25, %s41
      %p43 = scmp.eq.s32.totalorder %s17, 0
      %p44 = por %p42, %p43
      %s45 = ssub.s32 %s11, %s18
      %p46 = scmp.eq.s32.totalorder %s45, 0
      %s48 = sadd.s32 %s47, 1
      %s49 = scalar_select %p46, %s47, %s48
      %p52 = pneg %p46
      %p53 = scmp.eq.s32.totalorder %s11, 1
      %p54 = por %p52, %p53
      %p55 = scmp.ne.s32.totalorder %s47, %s50
      %p56 = scmp.eq.s32.totalorder %s11, 0
      %p57 = por %p55, %p56
      %p58 = scmp.ne.s32.totalorder %s47, %s50
      %p59 = scmp.eq.s32.totalorder %s16, 1
      %p60 = por %p58, %p59
      %p61 = scmp.ne.s32.totalorder %s50, %s51
      %p62 = scmp.eq.s32.totalorder %s16, 0
      %p63 = por %p61, %p62
      %p64 = scmp.ne.s32.totalorder %s50, %s51
      %p65 = scmp.eq.s32.totalorder %s17, 1
      %p66 = por %p64, %p65
      %p68 = scmp.ne.s32.totalorder %s51, %s67
      %p69 = scmp.eq.s32.totalorder %s17, 0
      %p70 = por %p68, %p69
      %s71 = ssub.s32 %s11, %s18
      %p72 = scmp.eq.s32.totalorder %s71, 0
      %s74 = sadd.s32 %s73, 1
      %s75 = scalar_select %p72, %s73, %s74
      %p78 = pneg %p72
      %p79 = scmp.eq.s32.totalorder %s11, 1
      %p80 = por %p78, %p79
      %p81 = scmp.ne.s32.totalorder %s73, %s76
      %p82 = scmp.eq.s32.totalorder %s11, 0
      %p83 = por %p81, %p82
      %p84 = scmp.ne.s32.totalorder %s73, %s76
      %p85 = scmp.eq.s32.totalorder %s16, 1
      %p86 = por %p84, %p85
      %p87 = scmp.ne.s32.totalorder %s76, %s77
      %p88 = scmp.eq.s32.totalorder %s16, 0
      %p89 = por %p87, %p88
      %p90 = scmp.ne.s32.totalorder %s76, %s77
      %p91 = scmp.eq.s32.totalorder %s17, 1
      %p92 = por %p90, %p91
      %p94 = scmp.ne.s32.totalorder %s77, %s93
      %p95 = scmp.eq.s32.totalorder %s17, 0
      %p96 = por %p94, %p95
      %p97 = scmp.le.s32.totalorder 1, %s11
      %p98 = scmp.lt.s32.totalorder %s11, 3
      %p99 = pnand %p97, %p98
      %p100 = pneg %p99
      // Predicated region
      $region9: #{tpu_custom_call.1} parent=5 // pred_check
        _
      $region10: #{tpu_custom_call.1} parent=5 // pred_check_branch
        %102 = sbr.rel (%p99) target = $region12
      $region11: #{tpu_custom_call.1} parent=5 // pred_region
        %s103 = ssub.s32 %s11, 1
      $region12: #{tpu_custom_call.1} parent=5 // pred_fallthru
        _
      %p104 = scmp.lt.s32.totalorder %s11, 2
      // Predicated region
      $region13: #{tpu_custom_call.1} parent=5 // pred_check
        %p105 = pneg %p104
      $region14: #{tpu_custom_call.1} parent=5 // pred_check_branch
        %107 = sbr.rel (%p105) target = $region16
      $region15: #{tpu_custom_call.1} parent=5 // pred_region
        // Predicated region
        $region17: #{tpu_custom_call.1} parent=15 // pred_check
          %p108 = pneg %p31
        $region18: #{tpu_custom_call.1} parent=15 // pred_check_branch
          %110 = sbr.rel (%p108) target = $region20
        $region19: #{tpu_custom_call.1} parent=15 // pred_region
          %s111 = smul.u32 3, %s11
          %s112 = ssub.s32 5, %s111
          %p113 = scmp.lt.s32.totalorder %s112, 3
          %s114 = scalar_select %p113, %s112, 3
          %s115 = smul.u32 8, %s114
          %p116 = scmp.lt.s32.totalorder %s111, 4
          %s117 = scalar_select %p116, %s111, 4
          %s118 = smul.addr %s117, 8
          %s119 = scalar_lea.vmem %s0, %s118
          %s120 = smul.u32 3, %s11
          %s121 = ssub.s32 5, %s120
          %p122 = scmp.lt.s32.totalorder %s121, 3
          %s123 = scalar_select %p122, %s121, 3
          %s124 = smul.u32 8, %s123
        $region20: #{tpu_custom_call.1} parent=15 // pred_fallthru
          _
        // Predicated region
        $region21: #{tpu_custom_call.1} parent=15 // pred_check
          %p125 = pneg %p57
        $region22: #{tpu_custom_call.1} parent=15 // pred_check_branch
          %127 = sbr.rel (%p125) target = $region24
        $region23: #{tpu_custom_call.1} parent=15 // pred_region
          %s128 = smul.u32 3, %s11
          %s129 = ssub.s32 625, %s128
          %p130 = scmp.lt.s32.totalorder %s129, 3
          %s131 = scalar_select %p130, %s129, 3
          %s132 = smul.u32 8, %s131
          %p133 = scmp.lt.s32.totalorder %s128, 624
          %s134 = scalar_select %p133, %s128, 624
          %s135 = smul.addr %s134, 8
          %s136 = scalar_lea.vmem %s1, %s135
          %s137 = smul.u32 3, %s11
          %s138 = ssub.s32 625, %s137
          %p139 = scmp.lt.s32.totalorder %s138, 3
          %s140 = scalar_select %p139, %s138, 3
          %s141 = smul.u32 8, %s140
        $region24: #{tpu_custom_call.1} parent=15 // pred_fallthru
          _
      $region16: #{tpu_custom_call.1} parent=5 // pred_fallthru
        _
      %p142 = scmp.le.s32.totalorder 1, %s11
      %p143 = scmp.lt.s32.totalorder %s11, 3
      %p144 = pnand %p142, %p143
      %p145 = pneg %p144
      // Predicated region
      $region25: #{tpu_custom_call.1} parent=5 // pred_check
        _
      $region26: #{tpu_custom_call.1} parent=5 // pred_check_branch
        %147 = sbr.rel (%p144) target = $region28
      $region27: #{tpu_custom_call.1} parent=5 // pred_region
        %s148 = ssub.s32 %s11, 1
        %s149 = smul.u32 3, %s16
        %s150 = ssub.s32 5, %s149
        %p151 = scmp.lt.s32.totalorder %s150, 3
        %s152 = scalar_select %p151, %s150, 3
        %s153 = smul.u32 8, %s152
        %p154 = scmp.lt.s32.totalorder %s149, 4
        %s155 = scalar_select %p154, %s149, 4
        %s156 = smul.addr %s155, 8
        %s157 = scalar_lea.vmem %s0, %s156
        %p158 = pneg %p37
        %p159 = pneg %p34
        %s160 = smul.u32 3, %s16
        %s161 = ssub.s32 625, %s160
        %p162 = scmp.lt.s32.totalorder %s161, 3
        %s163 = scalar_select %p162, %s161, 3
        %s164 = smul.u32 8, %s163
        %p165 = scmp.lt.s32.totalorder %s160, 624
        %s166 = scalar_select %p165, %s160, 624
        %s167 = smul.addr %s166, 8
        %s168 = scalar_lea.vmem %s1, %s167
        %p169 = pneg %p63
        %p170 = pneg %p60
        %p171 = pneg %p89
        %p172 = pneg %p86
        %s173 = sand.u32 %s76, 1
        %s174 = scalar_lea.sflag [#allocation3], %s173
        %s175 = sand.u32 %s76, 1
        %s176 = smul.addr %s175, 48
        %s177 = scalar_lea.vmem [#allocation2], %s176
        %s178 = smul.u32 3, %s16
        %s179 = ssub.s32 5, %s178
        %p180 = scmp.lt.s32.totalorder %s179, 3
        %s181 = scalar_select %p180, %s179, 3
        %s182 = smul.u32 8, %s181
        %p183 = scmp.lt.s32.totalorder %s178, 4
        %s184 = scalar_select %p183, %s178, 4
        %s185 = smul.addr %s184, 8
        %s186 = scalar_lea.vmem %s0, %s185
        %s187 = smul.u32 3, %s16
        %s188 = ssub.s32 5, %s187
        %p189 = scmp.lt.s32.totalorder %s188, 3
        %s190 = scalar_select %p189, %s188, 3
        %s191 = smul.u32 8, %s190
        %s192 = smul.u32 3, %s16
        %s193 = ssub.s32 625, %s192
        %p194 = scmp.lt.s32.totalorder %s193, 3
        %s195 = scalar_select %p194, %s193, 3
        %s196 = smul.u32 8, %s195
        %p197 = scmp.lt.s32.totalorder %s192, 624
        %s198 = scalar_select %p197, %s192, 624
        %s199 = smul.addr %s198, 8
        %s200 = scalar_lea.vmem %s1, %s199
        %s201 = smul.u32 3, %s16
        %s202 = ssub.s32 625, %s201
        %p203 = scmp.lt.s32.totalorder %s202, 3
        %s204 = scalar_select %p203, %s202, 3
        %s205 = smul.u32 8, %s204
        %s206 = smul.u32 3, %s16
        %s207 = ssub.s32 5, %s206
        %p208 = scmp.lt.s32.totalorder %s207, 3
        %s209 = scalar_select %p208, %s207, 3
        %s210 = smul.u32 8, %s209
        %s211 = smul.u32 %s210, 2
        %v212 = vld [vmem:[%s200] sm:$0xff]
        %v213 = vld [vmem:[%s200 + $0x8] sm:$0xff]
        %v214 = vld [vmem:[%s200 + $0x10] sm:$0xff]
        %v215 = vld [vmem:[%s186] sm:$0xff]
        %v216 = vld [vmem:[%s186 + $0x8] sm:$0xff]
        %v217 = vld [vmem:[%s186 + $0x10] sm:$0xff]
        %vm218 = vcmask 261120
        %219 = vst.msk [vmem:[%s177] sm:$0xff] %vm218, %v215
        %220 = vst.msk [vmem:[%s177 + $0x10] sm:$0xff] %vm218, %v216
        %221 = vst.msk [vmem:[%s177 + $0x20] sm:$0xff] %vm218, %v217
        %225 = vrot.lane.b32.xlu0 %v212, 32
        %v226 = vpop.permute.xlu0 %225
        %227 = vrot.lane.b32.xlu0 %v213, 32
        %v228 = vpop.permute.xlu0 %227
        %229 = vrot.lane.b32.xlu0 %v214, 32
        %v230 = vpop.permute.xlu0 %229
        %vm234 = vcmask 670976
        %235 = vst.msk [vmem:[%s177] sm:$0xff] %vm234, %v226
        %236 = vst.msk [vmem:[%s177 + $0x10] sm:$0xff] %vm234, %v228
        %237 = vst.msk [vmem:[%s177 + $0x20] sm:$0xff] %vm234, %v230
        %v238 = vld [vmem:[%s186] sm:$0xff]
        %v239 = vld [vmem:[%s186 + $0x8] sm:$0xff]
        %v240 = vld [vmem:[%s186 + $0x10] sm:$0xff]
        %244 = vrot.lane.b32.xlu0 %v238, 50
        %v245 = vpop.permute.xlu0 %244
        %246 = vrot.lane.b32.xlu0 %v239, 50
        %v247 = vpop.permute.xlu0 %246
        %248 = vrot.lane.b32.xlu0 %v240, 50
        %v249 = vpop.permute.xlu0 %248
        %vm253 = vcmask 933520
        %254 = vst.msk [vmem:[%s177] sm:$0xff] %vm253, %v245
        %255 = vst.msk [vmem:[%s177 + $0x10] sm:$0xff] %vm253, %v247
        %256 = vst.msk [vmem:[%s177 + $0x20] sm:$0xff] %vm253, %v249
        %257 = vrot.lane.b32.xlu0 %v212, 114
        %v258 = vpop.permute.xlu0 %257
        %259 = vrot.lane.b32.xlu0 %v213, 114
        %v260 = vpop.permute.xlu0 %259
        %261 = vrot.lane.b32.xlu0 %v214, 114
        %v262 = vpop.permute.xlu0 %261
        %vm266 = vcmask 1048464
        %267 = vst.msk [vmem:[%s177] sm:$0xff] %vm266, %v258
        %vm268 = vcmask 293888
        %269 = vst.msk [vmem:[%s177 + $0x8] sm:$0xff] %vm268, %v258
        %270 = vst.msk [vmem:[%s177 + $0x10] sm:$0xff] %vm266, %v260
        %271 = vst.msk [vmem:[%s177 + $0x18] sm:$0xff] %vm268, %v260
        %272 = vst.msk [vmem:[%s177 + $0x20] sm:$0xff] %vm266, %v262
        %273 = vst.msk [vmem:[%s177 + $0x28] sm:$0xff] %vm268, %v262
        %s274 = sand.u32 %s76, 1
        %s275 = scalar_lea.sflag [#allocation3], %s274
        %s276 = sand.u32 %s76, 1
        %s277 = smul.addr %s276, 48
        %s278 = scalar_lea.vmem [#allocation2], %s277
        // Predicated region
        $region29: #{tpu_custom_call.1} parent=27 // pred_check
          %p279 = pneg %p86
        $region30: #{tpu_custom_call.1} parent=27 // pred_check_branch
          %281 = sbr.rel (%p279) target = $region32
        $region31: #{tpu_custom_call.1} parent=27 // pred_region
          %s282 = smul.u32 3, %s16
          %s283 = ssub.s32 5, %s282
          %p284 = scmp.lt.s32.totalorder %s283, 3
          %s285 = scalar_select %p284, %s283, 3
          %s286 = smul.u32 8, %s285
          %s287 = smul.u32 %s286, 2
          %s288 = ssub.s32 48, %s287
          %s289 = sshll.u32 %s288, 4
          %290 = vsyncadd %s275, %s289
          %p291 = scmp.ne.s32.totalorder 0, %s287
          %s292 = smul.addr %s282, 2
          %s293 = smul.addr %s292, 8
          %s294 = scalar_lea.hbm %s2, %s293
          %s295 = smul.u32 16, %s285
          %s296 = sshll.u32 %s278, 4
          %s297 = int_to_ptr.vmem [resolvable:$true] %s296
          %s298 = sshll.u32 %s294, 4
          %s299 = int_to_ptr.hbm [resolvable:$true] %s298
          %s300 = sshll.u32 %s295, 4
          %304 = dma.vmem_to_hbm [thread:$0]  (%p291), %s297, %s300, %s299, %s275, 256, 256, 16
        $region32: #{tpu_custom_call.1} parent=27 // pred_fallthru
          _
      $region28: #{tpu_custom_call.1} parent=5 // pred_fallthru
        _
      %p305 = scmp.le.s32.totalorder 2, %s11
      // Predicated region
      $region33: #{tpu_custom_call.1} parent=5 // pred_check
        %p306 = pneg %p305
      $region34: #{tpu_custom_call.1} parent=5 // pred_check_branch
        %308 = sbr.rel (%p306) target = $region36
      $region35: #{tpu_custom_call.1} parent=5 // pred_region
        %s309 = ssub.s32 %s11, 2
        // Predicated region
        $region37: #{tpu_custom_call.1} parent=35 // pred_check
          %p310 = pneg %p92
        $region38: #{tpu_custom_call.1} parent=35 // pred_check_branch
          %312 = sbr.rel (%p310) target = $region40
        $region39: #{tpu_custom_call.1} parent=35 // pred_region
          %s313 = sand.u32 %s77, 1
          %s314 = scalar_lea.sflag [#allocation3], %s313
          %s315 = sand.u32 %s77, 1
          %s316 = smul.addr %s315, 48
          %s317 = scalar_lea.vmem [#allocation2], %s316
          %319 = dma.done %s314, 768
        $region40: #{tpu_custom_call.1} parent=35 // pred_fallthru
          _
      $region36: #{tpu_custom_call.1} parent=5 // pred_fallthru
        _
    $region6: #{tpu_custom_call.1} parent=1 // loop_footer
      %s15 = sadd.s32 1, %s11
    $region7: #{tpu_custom_call.1} parent=1 // loop_footer_branch
      %10 = sbr.rel target = $region3
    $region8: #{tpu_custom_call.1} parent=1 // loop_exit
      _
    %320 = vsyncpa [#allocation3], 1
    %s321 = scalar_lea.sflag [#allocation3], 1
    %322 = vsyncpa %s321, 1

</llo_original>
